<compile_context>
chip_gen: v6e
topology: v6e:2x2x1
jax: 0.10.0
libtpu: 0.0.40
codegen_flags: <defaults>
</compile_context>

<pallas_src>
import math
import jax
import jax.numpy as jnp
from jax.experimental import pallas as pl
from jax.experimental.pallas import tpu as pltpu

_LANES = 128
_MAX_ROW_GROUPS = 64                   # hard cap: 8192 rows per grid step
_TARGET_STEP_BYTES = 4 * 1024 * 1024   # ~4 MiB of HBM data per grid step


def _vmem_limit_bytes():
    """Generation-dependent VMEM budget: 96 MiB on 128-MiB parts (v5e/v6e), 48 MiB on v7x."""
    cap = None
    try:
        info = pltpu.get_tpu_info()
        for attr in ("vmem_capacity_bytes", "vmem_size_bytes", "vmem_bytes"):
            v = getattr(info, attr, None)
            if v:
                cap = int(v)
                break
    except Exception:
        cap = None
    if cap is None:
        cap = 64 * 1024 * 1024          # unknown: assume the smallest (v7x)
    if cap >= 128 * 1024 * 1024:
        return 96 * 1024 * 1024
    return 48 * 1024 * 1024


def _pick_row_groups(n128, F, x_itemsize, vmem_limit, max_row_groups):
    """Rows-per-tile (in 128-row groups): big enough to amortize step overhead,
    small enough that the double-buffered x stream fits ~half the VMEM budget."""
    # TODO(synk): for F so large that even g=1 double-buffered does not fit
    #             (~F > 48k f32 on v7x) add an "arbitrary" F-reduction grid axis
    #             with a (g,128) f32 VMEM accumulator and pl.when init/finalize.
    # TODO(synk): for tiny F, pack floor(128/F) rows per lane group to cut the
    #             128/F lane-padding waste (only if DMA still binds after this).
    f_pad = -(-F // _LANES) * _LANES
    per_group_vmem = 2 * _LANES * f_pad * x_itemsize          # double-buffered x
    g_vmem = max(1, (vmem_limit // 2) // per_group_vmem)
    per_group_hbm = _LANES * F * x_itemsize
    g_target = max(1, -(-_TARGET_STEP_BYTES // per_group_hbm))
    g = max(1, min(g_target, g_vmem, max_row_groups))
    if g >= n128:
        return n128                     # one tile covers the whole batch
    # Prefer a g that divides n128 exactly (single call, no tail slice), as long
    # as it stays within ~2x of the chosen size.
    for cand in range(g, g // 2, -1):
        if n128 % cand == 0:
            return cand
    return g


def _logreg_kernel(x_ref, w_ref, b_ref, o_ref):
    # x_ref: (G, 128, F)  batch tile in the caller's dtype, features on lanes
    # w_ref: (1, 1, F)    f32 weights, VMEM-resident across the whole grid
    # b_ref: (1, 1)       f32 bias scalar in SMEM
    # o_ref: (G, 128)     lane-dense sigmoid output (leading tile dim squeezed)
    x = x_ref[...].astype(jnp.float32)   # in-kernel upcast; free under mem-bound
    w = w_ref[...]
    # VPU multiply + XLU lane reduction (f32 accumulate); avoids the N=1 MXU matmul.
    z = jnp.sum(x * w, axis=-1) + b_ref[0, 0]            # (G, 128)
    o_ref[...] = jax.nn.sigmoid(z).astype(o_ref.dtype)


def _logreg_call(x3, w3, b2, g, n_tiles, vmem_limit, out_dtype):
    _, _, F = x3.shape
    rows = n_tiles * g * _LANES
    x_bytes = x3.dtype.itemsize
    out_bytes = jnp.dtype(out_dtype).itemsize
    return pl.pallas_call(
        _logreg_kernel,
        out_shape=jax.ShapeDtypeStruct((n_tiles, g, _LANES), out_dtype),
        grid=(n_tiles,),
        in_specs=[
            # Streamed batch tile; double-buffered by the BlockSpec pipeline.
            # TODO(synk): pipeline_mode=pl.Buffered(3) if profiling still shows
            #             exposed DMA latency at tile boundaries.
            pl.BlockSpec((g, _LANES, F), lambda i: (i, 0, 0)),
            pl.BlockSpec((1, 1, F), lambda i: (0, 0, 0)),        # resident weights
            pl.BlockSpec(memory_space=pltpu.MemorySpace.SMEM),   # scalar bias
        ],
        out_specs=pl.BlockSpec((None, g, _LANES), lambda i: (i, 0, 0)),
        compiler_params=pltpu.CompilerParams(
            dimension_semantics=("parallel",),   # shard batch across v7x's 2 TCs
            vmem_limit_bytes=vmem_limit,
        ),
        cost_estimate=pl.CostEstimate(
            flops=2 * rows * F,
            transcendentals=rows,
            bytes_accessed=x_bytes * rows * F + 4 * (F + 1) + out_bytes * rows,
        ),
    )(x3, w3, b2)


def logistic_regression(x, weight, bias, *, max_row_groups=None):
    """sigmoid(x @ weight.T + bias)

    x:      [B, F] (f32 or bf16 — dtype preserved through HBM)
    weight: [1, F] (PyTorch nn.Linear(F, 1) layout)
    bias:   [1]
    returns [B, 1] in x's dtype
    """
    B, F = x.shape
    out_dtype = x.dtype
    w3 = weight.reshape(1, 1, F).astype(jnp.float32)
    b2 = bias.reshape(1, 1).astype(jnp.float32)

    vmem_limit = _vmem_limit_bytes()
    n128 = -(-B // _LANES)
    b_pad = n128 * _LANES
    if b_pad != B:
        # Only a sub-128-row tail needs padding; at most 127 zero rows.
        # TODO(synk): a fully zero-copy ragged-tail path (2-D blocks over the raw
        #             (B, F) prefix) would avoid this whole-array pad for huge,
        #             non-128-multiple batches.
        x = jnp.pad(x, ((0, b_pad - B), (0, 0)))
    x3 = x.reshape(n128, _LANES, F)          # metadata-only reshape

    cap = _MAX_ROW_GROUPS if max_row_groups is None else max_row_groups
    g = _pick_row_groups(n128, F, x3.dtype.itemsize, vmem_limit, cap)
    n_main_tiles = n128 // g
    main_groups = n_main_tiles * g
    rem_groups = n128 - main_groups

    # Main call: zero-copy, covers the first n_main_tiles * g row-groups of x3.
    parts = [
        _logreg_call(x3, w3, b2, g, n_main_tiles, vmem_limit, out_dtype)
        .reshape(main_groups * _LANES)
    ]
    if rem_groups > 0:
        # Tail smaller than one tile: tiny slice (< g*128 rows), one extra call.
        x3_rem = x3[main_groups:]
        parts.append(
            _logreg_call(x3_rem, w3, b2, rem_groups, 1, vmem_limit, out_dtype)
            .reshape(rem_groups * _LANES)
        )
    out = parts[0] if len(parts) == 1 else jnp.concatenate(parts)
    return out[:B].reshape(B, 1)


if __name__ == "__main__":
    # Breast-cancer-style shapes: 30 features.
    batch, n_features = 8, 30

    key = jax.random.PRNGKey(0)
    kx, kw, kb, kx2, kx3, kx4 = jax.random.split(key, 6)

    # nn.Linear-style init: U(-1/sqrt(fan_in), 1/sqrt(fan_in)); PyTorch layouts.
    bound = 1.0 / math.sqrt(n_features)
    weight = jax.random.uniform(kw, (1, n_features), jnp.float32, -bound, bound)
    bias = jax.random.uniform(kb, (1,), jnp.float32, -bound, bound)

    def ref(xv):
        return jax.nn.sigmoid(xv.astype(jnp.float32) @ weight.T + bias)

    # 1) Small f32 mini-batch (single tile).
    x = jax.random.normal(kx, (batch, n_features), jnp.float32)
    y = logistic_regression(x, weight, bias)
    jax.block_until_ready(y)
    assert y.shape == (batch, 1)
    assert jnp.allclose(y, ref(x), atol=1e-5, rtol=1e-5)

    # 2) Dataset-sized f32 batch (569 rows, non-multiple of 128 -> tail pad path).
    x2 = jax.random.normal(kx2, (569, n_features), jnp.float32)
    y2 = logistic_regression(x2, weight, bias)
    jax.block_until_ready(y2)
    assert y2.shape == (569, 1)
    assert jnp.allclose(y2, ref(x2), atol=1e-5, rtol=1e-5)

    # 3) bf16 inputs stay bf16 through HBM (halved read traffic).
    x3 = jax.random.normal(kx3, (256, n_features), jnp.bfloat16)
    y3 = logistic_regression(x3, weight, bias)
    jax.block_until_ready(y3)
    assert y3.shape == (256, 1)
    assert jnp.allclose(y3.astype(jnp.float32), ref(x3), atol=1e-2, rtol=1e-2)

    # 4) Exercise the multi-tile + tail-call path (forced small tiles).
    x4 = jax.random.normal(kx4, (896, n_features), jnp.float32)
    y4 = logistic_regression(x4, weight, bias, max_row_groups=2)
    jax.block_until_ready(y4)
    assert y4.shape == (896, 1)
    assert jnp.allclose(y4, ref(x4), atol=1e-5, rtol=1e-5)

    print("KERNEL_OK")
</pallas_src>

<mosaic_0001>
module attributes {stable_mosaic.version = 11 : i64} {
  func.func @_logreg_kernel(%arg0: i32, %arg1: memref<1x128x30xf32, #tpu.memory_space<vmem>>, %arg2: memref<1x1x30xf32, #tpu.memory_space<vmem>>, %arg3: memref<1x1xf32, #tpu.memory_space<smem>>, %arg4: memref<1x1x128xf32, #tpu.memory_space<vmem>>) attributes {dimension_semantics = [#tpu.dimension_semantics<parallel>], iteration_bounds = array<i64: 1>, scalar_prefetch = 0 : i64, scratch_operands = 0 : i64, tpu.core_type = #tpu.core_type<tc>, window_params = [{transform_indices = @transform_0, window_bounds = array<i64: 1, 128, 30>}, {pipeline_mode = #tpu.pipeline_mode<synchronous>, transform_indices = @transform_1, window_bounds = array<i64: 1, 1, 30>}, {transform_indices = @transform_2, window_bounds = array<i64: 1, 1>}, {transform_indices = @transform_3, window_bounds = array<i64: 1, 1, 128>}]} {
    %c0 = arith.constant 0 : index
    %c0_0 = arith.constant 0 : index
    %c0_1 = arith.constant 0 : index
    %0 = vector.load %arg1[%c0, %c0_0, %c0_1] : memref<1x128x30xf32, #tpu.memory_space<vmem>>, vector<1x128x30xf32>
    %c0_2 = arith.constant 0 : index
    %c0_3 = arith.constant 0 : index
    %c0_4 = arith.constant 0 : index
    %1 = vector.load %arg2[%c0_2, %c0_3, %c0_4] : memref<1x1x30xf32, #tpu.memory_space<vmem>>, vector<1x1x30xf32>
    %2 = vector.broadcast %1 : vector<1x1x30xf32> to vector<1x128x30xf32>
    %3 = arith.mulf %0, %2 : vector<1x128x30xf32>
    %cst = arith.constant dense<0.000000e+00> : vector<1x128xf32>
    %4 = vector.multi_reduction <add>, %3, %cst [2] : vector<1x128x30xf32> to vector<1x128xf32>
    %c0_5 = arith.constant 0 : index
    %c0_6 = arith.constant 0 : index
    %5 = memref.load %arg3[%c0_5, %c0_6] : memref<1x1xf32, #tpu.memory_space<smem>>
    %6 = vector.broadcast %5 : f32 to vector<1x128xf32>
    %7 = arith.addf %4, %6 : vector<1x128xf32>
    %8 = arith.negf %7 : vector<1x128xf32>
    %9 = math.exp %8 : vector<1x128xf32>
    %cst_7 = arith.constant 1.000000e+00 : f32
    %10 = vector.broadcast %cst_7 : f32 to vector<1x128xf32>
    %11 = arith.addf %10, %9 : vector<1x128xf32>
    %12 = arith.divf %10, %11 : vector<1x128xf32>
    %c0_8 = arith.constant 0 : index
    %c0_9 = arith.constant 0 : index
    %c0_10 = arith.constant 0 : index
    %13 = vector.load %arg4[%c0_8, %c0_9, %c0_10] : memref<1x1x128xf32, #tpu.memory_space<vmem>>, vector<1x1x128xf32>
    %14 = vector.shape_cast %13 : vector<1x1x128xf32> to vector<1x128xf32>
    %15 = vector.shape_cast %12 : vector<1x128xf32> to vector<1x1x128xf32>
    tpu.vector_store %arg4[%c0_8, %c0_9, %c0_10], %15 {strides = array<i32>} : memref<1x1x128xf32, #tpu.memory_space<vmem>>, vector<1x1x128xf32>,
    return
  }
  func.func @transform_0(%arg0: i32) -> (i32, i32, i32) {
    %c0_i32 = arith.constant 0 : i32
    %c0_i32_0 = arith.constant 0 : i32
    %c0_i32_1 = arith.constant 0 : i32
    return %arg0, %c0_i32, %c0_i32_0 : i32, i32, i32
  }
  func.func @transform_1(%arg0: i32) -> (i32, i32, i32) {
    %c0_i32 = arith.constant 0 : i32
    %c0_i32_0 = arith.constant 0 : i32
    %c0_i32_1 = arith.constant 0 : i32
    %c0_i32_2 = arith.constant 0 : i32
    return %c0_i32, %c0_i32_0, %c0_i32_1 : i32, i32, i32
  }
  func.func @transform_2(%arg0: i32) -> (i32, i32) {
    %c0_i32 = arith.constant 0 : i32
    %c0_i32_0 = arith.constant 0 : i32
    %c0_i32_1 = arith.constant 0 : i32
    return %c0_i32, %c0_i32_0 : i32, i32
  }
  func.func @transform_3(%arg0: i32) -> (i32, i32, i32) {
    %c0_i32 = arith.constant 0 : i32
    %c0_i32_0 = arith.constant 0 : i32
    %c0_i32_1 = arith.constant 0 : i32
    return %arg0, %c0_i32, %c0_i32_0 : i32, i32, i32
  }
}

</mosaic_0001>

<llo_original>
// kernel: tpu_custom_call.1
$region0: #{tpu_custom_call.1}
  #allocation0 [shape = 'u32[]', space=smem, size = 0x4, offset = 0x4, fixed_abs, tag = 'smem constant byte address 0x4 - core index']
  #allocation1 [shape = 'u32[144,128]{1,0:T(1,128)}', space=vmem, size = 0x12000, scoped, tag = 'internal scratch']
  #allocation2 [shape = 'f32[1,1]{1,0:T(1,128)S(6)}', space=smem, size = 0x200, scoped, tag = 'scoped memory for tpu_custom_call.1']
  %s0 = inlined_call_operand.vmem [shape: f32[1,128,30], index: 0, kind: input, shape index: {}]
  %s1 = inlined_call_operand.vmem [shape: f32[1,1,30], index: 1, kind: input, shape index: {}]
  %s2 = inlined_call_operand.<no memory space> [shape: f32[1,1], index: 2, kind: input, shape index: {}]
  %s3 = inlined_call_operand.hbm [shape: f32[1,1,128], index: 3, kind: output, shape index: {}]
  %s4 = sld [smem:[#allocation0]]
  $region22: #{tpu_custom_call.1} parent=0
    _
  %s6 = ssub.s32 1, %s4
  %s7 = scalar_select 0, %s6, %s4
  %8 = sst [smem:[#allocation2]] %s2
  $region1: #{tpu_custom_call.1} parent=0
    #allocation3 [shape = 'u8[512]{0}', space=vmem, size = 0x400, scoped, tag = 'output window, operand 0, single buffered']
    #allocation4 [shape = 's32[1]{0}', space=sflag, size = 0x4, scoped, tag = 'scoped memory for tpu_custom_call.1']
    %9 = vsyncpa [#allocation4], 0
    // Predicated region
    $region2: #{tpu_custom_call.1} parent=1 // pred_check
      _
    $region3: #{tpu_custom_call.1} parent=1 // pred_check_branch
      %11 = sbr.rel (0) target = $region5
    $region4: #{tpu_custom_call.1} parent=1 // pred_region
      _
    $region5: #{tpu_custom_call.1} parent=1 // pred_fallthru
      _
    // Predicated region
    $region6: #{tpu_custom_call.1} parent=1 // pred_check
      _
    $region7: #{tpu_custom_call.1} parent=1 // pred_check_branch
      %13 = sbr.rel (0) target = $region9
    $region8: #{tpu_custom_call.1} parent=1 // pred_region
      _
    $region9: #{tpu_custom_call.1} parent=1 // pred_fallthru
      _
    // Predicated region
    $region10: #{tpu_custom_call.1} parent=1 // pred_check
      _
    $region11: #{tpu_custom_call.1} parent=1 // pred_check_branch
      %15 = sbr.rel (0) target = $region13
    $region12: #{tpu_custom_call.1} parent=1 // pred_region
      _
    $region13: #{tpu_custom_call.1} parent=1 // pred_fallthru
      _
    %v16 = vld [vmem:[%s0] sm:$0xff]
    %v17 = vld [vmem:[%s0 + $0x8] sm:$0xff]
    %v18 = vld [vmem:[%s0 + $0x10] sm:$0xff]
    %v19 = vld [vmem:[%s0 + $0x18] sm:$0xff]
    %v20 = vld [vmem:[%s0 + $0x20] sm:$0xff]
    %v21 = vld [vmem:[%s0 + $0x28] sm:$0xff]
    %v22 = vld [vmem:[%s0 + $0x30] sm:$0xff]
    %v23 = vld [vmem:[%s0 + $0x38] sm:$0xff]
    %v24 = vld [vmem:[%s0 + $0x40] sm:$0xff]
    %v25 = vld [vmem:[%s0 + $0x48] sm:$0xff]
    %v26 = vld [vmem:[%s0 + $0x50] sm:$0xff]
    %v27 = vld [vmem:[%s0 + $0x58] sm:$0xff]
    %v28 = vld [vmem:[%s0 + $0x60] sm:$0xff]
    %v29 = vld [vmem:[%s0 + $0x68] sm:$0xff]
    %v30 = vld [vmem:[%s0 + $0x70] sm:$0xff]
    %v31 = vld [vmem:[%s0 + $0x78] sm:$0xff]
    %v32 = vld [vmem:[%s1] sm:$0x1]
    %v34 = vlaneseq
    %v35 = vshrl.u32 %v34, 7
    %v36 = vsub.s32 0, %v35
    %v37 = vrot.slane %v32, %v36
    %v39 = vmul.f32 %v16, %v37
    %v40 = vmul.f32 %v17, %v37
    %v41 = vmul.f32 %v18, %v37
    %v42 = vmul.f32 %v19, %v37
    %v43 = vmul.f32 %v20, %v37
    %v44 = vmul.f32 %v21, %v37
    %v45 = vmul.f32 %v22, %v37
    %v46 = vmul.f32 %v23, %v37
    %v47 = vmul.f32 %v24, %v37
    %v48 = vmul.f32 %v25, %v37
    %v49 = vmul.f32 %v26, %v37
    %v50 = vmul.f32 %v27, %v37
    %v51 = vmul.f32 %v28, %v37
    %v52 = vmul.f32 %v29, %v37
    %v53 = vmul.f32 %v30, %v37
    %v54 = vmul.f32 %v31, %v37
    %vm55 = vcmask 244736
    %v56 = vsel %vm55, %v39, 0.0
    %57 = vadd.xlane.f32.xlu0 %v56
    %v58 = vpop.xlane.xlu0 %57
    %v59 = vsel %vm55, %v40, 0.0
    %60 = vadd.xlane.f32.xlu0 %v59
    %v61 = vpop.xlane.xlu0 %60
    %v62 = vsel %vm55, %v41, 0.0
    %63 = vadd.xlane.f32.xlu0 %v62
    %v64 = vpop.xlane.xlu0 %63
    %v65 = vsel %vm55, %v42, 0.0
    %66 = vadd.xlane.f32.xlu0 %v65
    %v67 = vpop.xlane.xlu0 %66
    %v68 = vsel %vm55, %v43, 0.0
    %69 = vadd.xlane.f32.xlu0 %v68
    %v70 = vpop.xlane.xlu0 %69
    %v71 = vsel %vm55, %v44, 0.0
    %72 = vadd.xlane.f32.xlu0 %v71
    %v73 = vpop.xlane.xlu0 %72
    %v74 = vsel %vm55, %v45, 0.0
    %75 = vadd.xlane.f32.xlu0 %v74
    %v76 = vpop.xlane.xlu0 %75
    %v77 = vsel %vm55, %v46, 0.0
    %78 = vadd.xlane.f32.xlu0 %v77
    %v79 = vpop.xlane.xlu0 %78
    %v80 = vsel %vm55, %v47, 0.0
    %81 = vadd.xlane.f32.xlu0 %v80
    %v82 = vpop.xlane.xlu0 %81
    %v83 = vsel %vm55, %v48, 0.0
    %84 = vadd.xlane.f32.xlu0 %v83
    %v85 = vpop.xlane.xlu0 %84
    %v86 = vsel %vm55, %v49, 0.0
    %87 = vadd.xlane.f32.xlu0 %v86
    %v88 = vpop.xlane.xlu0 %87
    %v89 = vsel %vm55, %v50, 0.0
    %90 = vadd.xlane.f32.xlu0 %v89
    %v91 = vpop.xlane.xlu0 %90
    %v92 = vsel %vm55, %v51, 0.0
    %93 = vadd.xlane.f32.xlu0 %v92
    %v94 = vpop.xlane.xlu0 %93
    %v95 = vsel %vm55, %v52, 0.0
    %96 = vadd.xlane.f32.xlu0 %v95
    %v97 = vpop.xlane.xlu0 %96
    %v98 = vsel %vm55, %v53, 0.0
    %99 = vadd.xlane.f32.xlu0 %v98
    %v100 = vpop.xlane.xlu0 %99
    %v101 = vsel %vm55, %v54, 0.0
    %102 = vadd.xlane.f32.xlu0 %v101
    %v103 = vpop.xlane.xlu0 %102
    %s104 = sld [smem:[#allocation2]]
    %v105 = vstv %s104
    %v106 = vadd.f32 %v58, %v105
    %v107 = vadd.f32 %v61, %v105
    %v108 = vadd.f32 %v64, %v105
    %v109 = vadd.f32 %v67, %v105
    %v110 = vadd.f32 %v70, %v105
    %v111 = vadd.f32 %v73, %v105
    %v112 = vadd.f32 %v76, %v105
    %v113 = vadd.f32 %v79, %v105
    %v114 = vadd.f32 %v82, %v105
    %v115 = vadd.f32 %v85, %v105
    %v116 = vadd.f32 %v88, %v105
    %v117 = vadd.f32 %v91, %v105
    %v118 = vadd.f32 %v94, %v105
    %v119 = vadd.f32 %v97, %v105
    %v120 = vadd.f32 %v100, %v105
    %v121 = vadd.f32 %v103, %v105
    %v122 = vxor.u32 %v106, 2147483648
    %v123 = vxor.u32 %v107, 2147483648
    %v124 = vxor.u32 %v108, 2147483648
    %v125 = vxor.u32 %v109, 2147483648
    %v126 = vxor.u32 %v110, 2147483648
    %v127 = vxor.u32 %v111, 2147483648
    %v128 = vxor.u32 %v112, 2147483648
    %v129 = vxor.u32 %v113, 2147483648
    %v130 = vxor.u32 %v114, 2147483648
    %v131 = vxor.u32 %v115, 2147483648
    %v132 = vxor.u32 %v116, 2147483648
    %v133 = vxor.u32 %v117, 2147483648
    %v134 = vxor.u32 %v118, 2147483648
    %v135 = vxor.u32 %v119, 2147483648
    %v136 = vxor.u32 %v120, 2147483648
    %v137 = vxor.u32 %v121, 2147483648
    %v138 = vmul.f32 %v122, 1.442695
    %v139 = vpow.pop %v138
    %v140 = vmul.f32 %v123, 1.442695
    %v141 = vpow.pop %v140
    %v142 = vmul.f32 %v124, 1.442695
    %v143 = vpow.pop %v142
    %v144 = vmul.f32 %v125, 1.442695
    %v145 = vpow.pop %v144
    %v146 = vmul.f32 %v126, 1.442695
    %v147 = vpow.pop %v146
    %v148 = vmul.f32 %v127, 1.442695
    %v149 = vpow.pop %v148
    %v150 = vmul.f32 %v128, 1.442695
    %v151 = vpow.pop %v150
    %v152 = vmul.f32 %v129, 1.442695
    %v153 = vpow.pop %v152
    %v154 = vmul.f32 %v130, 1.442695
    %v155 = vpow.pop %v154
    %v156 = vmul.f32 %v131, 1.442695
    %v157 = vpow.pop %v156
    %v158 = vmul.f32 %v132, 1.442695
    %v159 = vpow.pop %v158
    %v160 = vmul.f32 %v133, 1.442695
    %v161 = vpow.pop %v160
    %v162 = vmul.f32 %v134, 1.442695
    %v163 = vpow.pop %v162
    %v164 = vmul.f32 %v135, 1.442695
    %v165 = vpow.pop %v164
    %v166 = vmul.f32 %v136, 1.442695
    %v167 = vpow.pop %v166
    %v168 = vmul.f32 %v137, 1.442695
    %v169 = vpow.pop %v168
    %v170 = vadd.f32 %v139, 1.0
    %v171 = vadd.f32 %v141, 1.0
    %v172 = vadd.f32 %v143, 1.0
    %v173 = vadd.f32 %v145, 1.0
    %v174 = vadd.f32 %v147, 1.0
    %v175 = vadd.f32 %v149, 1.0
    %v176 = vadd.f32 %v151, 1.0
    %v177 = vadd.f32 %v153, 1.0
    %v178 = vadd.f32 %v155, 1.0
    %v179 = vadd.f32 %v157, 1.0
    %v180 = vadd.f32 %v159, 1.0
    %v181 = vadd.f32 %v161, 1.0
    %v182 = vadd.f32 %v163, 1.0
    %v183 = vadd.f32 %v165, 1.0
    %v184 = vadd.f32 %v167, 1.0
    %v185 = vadd.f32 %v169, 1.0
    %v186 = vrcp.pop %v170
    %v187 = vmul.f32 1.0, %v186
    %v188 = vrcp.pop %v171
    %v189 = vmul.f32 1.0, %v188
    %v190 = vrcp.pop %v172
    %v191 = vmul.f32 1.0, %v190
    %v192 = vrcp.pop %v173
    %v193 = vmul.f32 1.0, %v192
    %v194 = vrcp.pop %v174
    %v195 = vmul.f32 1.0, %v194
    %v196 = vrcp.pop %v175
    %v197 = vmul.f32 1.0, %v196
    %v198 = vrcp.pop %v176
    %v199 = vmul.f32 1.0, %v198
    %v200 = vrcp.pop %v177
    %v201 = vmul.f32 1.0, %v200
    %v202 = vrcp.pop %v178
    %v203 = vmul.f32 1.0, %v202
    %v204 = vrcp.pop %v179
    %v205 = vmul.f32 1.0, %v204
    %v206 = vrcp.pop %v180
    %v207 = vmul.f32 1.0, %v206
    %v208 = vrcp.pop %v181
    %v209 = vmul.f32 1.0, %v208
    %v210 = vrcp.pop %v182
    %v211 = vmul.f32 1.0, %v210
    %v212 = vrcp.pop %v183
    %v213 = vmul.f32 1.0, %v212
    %v214 = vrcp.pop %v184
    %v215 = vmul.f32 1.0, %v214
    %v216 = vrcp.pop %v185
    %v217 = vmul.f32 1.0, %v216
    %v234 = vlaneseq
    %v235 = vand.u32 %v234, 127
    %v236 = vlaneseq
    %v237 = vshrl.u32 %v236, 7
    %v238 = vsub.s32 %v235, %v237
    %v239 = vrot.slane %v187, %v238
    %v240 = vadd.s32 %v235, 4294967288
    %v241 = vlaneseq
    %v242 = vshrl.u32 %v241, 7
    %v243 = vsub.s32 %v240, %v242
    %v244 = vrot.slane %v189, %v243
    %vm245 = vcmask 130112
    %v246 = vsel %vm245, %v244, %v239
    %v247 = vadd.s32 %v235, 4294967280
    %v248 = vlaneseq
    %v249 = vshrl.u32 %v248, 7
    %v250 = vsub.s32 %v247, %v249
    %v251 = vrot.slane %v191, %v250
    %vm252 = vcmask 195712
    %v253 = vsel %vm252, %v251, %v246
    %v254 = vadd.s32 %v235, 4294967272
    %v255 = vlaneseq
    %v256 = vshrl.u32 %v255, 7
    %v257 = vsub.s32 %v254, %v256
    %v258 = vrot.slane %v193, %v257
    %vm259 = vcmask 261312
    %v260 = vsel %vm259, %v258, %v253
    %v261 = vadd.s32 %v235, 4294967264
    %v262 = vlaneseq
    %v263 = vshrl.u32 %v262, 7
    %v264 = vsub.s32 %v261, %v263
    %v265 = vrot.slane %v195, %v264
    %vm266 = vcmask 326912
    %v267 = vsel %vm266, %v265, %v260
    %v268 = vadd.s32 %v235, 4294967256
    %v269 = vlaneseq
    %v270 = vshrl.u32 %v269, 7
    %v271 = vsub.s32 %v268, %v270
    %v272 = vrot.slane %v197, %v271
    %vm273 = vcmask 392512
    %v274 = vsel %vm273, %v272, %v267
    %v275 = vadd.s32 %v235, 4294967248
    %v276 = vlaneseq
    %v277 = vshrl.u32 %v276, 7
    %v278 = vsub.s32 %v275, %v277
    %v279 = vrot.slane %v199, %v278
    %vm280 = vcmask 458112
    %v281 = vsel %vm280, %v279, %v274
    %v282 = vadd.s32 %v235, 4294967240
    %v283 = vlaneseq
    %v284 = vshrl.u32 %v283, 7
    %v285 = vsub.s32 %v282, %v284
    %v286 = vrot.slane %v201, %v285
    %vm287 = vcmask 523712
    %v288 = vsel %vm287, %v286, %v281
    %v289 = vadd.s32 %v235, 4294967232
    %v290 = vlaneseq
    %v291 = vshrl.u32 %v290, 7
    %v292 = vsub.s32 %v289, %v291
    %v293 = vrot.slane %v203, %v292
    %vm294 = vcmask 589312
    %v295 = vsel %vm294, %v293, %v288
    %v296 = vadd.s32 %v235, 4294967224
    %v297 = vlaneseq
    %v298 = vshrl.u32 %v297, 7
    %v299 = vsub.s32 %v296, %v298
    %v300 = vrot.slane %v205, %v299
    %vm301 = vcmask 654912
    %v302 = vsel %vm301, %v300, %v295
    %v303 = vadd.s32 %v235, 4294967216
    %v304 = vlaneseq
    %v305 = vshrl.u32 %v304, 7
    %v306 = vsub.s32 %v303, %v305
    %v307 = vrot.slane %v207, %v306
    %vm308 = vcmask 720512
    %v309 = vsel %vm308, %v307, %v302
    %v310 = vadd.s32 %v235, 4294967208
    %v311 = vlaneseq
    %v312 = vshrl.u32 %v311, 7
    %v313 = vsub.s32 %v310, %v312
    %v314 = vrot.slane %v209, %v313
    %vm315 = vcmask 786112
    %v316 = vsel %vm315, %v314, %v309
    %v317 = vadd.s32 %v235, 4294967200
    %v318 = vlaneseq
    %v319 = vshrl.u32 %v318, 7
    %v320 = vsub.s32 %v317, %v319
    %v321 = vrot.slane %v211, %v320
    %vm322 = vcmask 851712
    %v323 = vsel %vm322, %v321, %v316
    %v324 = vadd.s32 %v235, 4294967192
    %v325 = vlaneseq
    %v326 = vshrl.u32 %v325, 7
    %v327 = vsub.s32 %v324, %v326
    %v328 = vrot.slane %v213, %v327
    %vm329 = vcmask 917312
    %v330 = vsel %vm329, %v328, %v323
    %v331 = vadd.s32 %v235, 4294967184
    %v332 = vlaneseq
    %v333 = vshrl.u32 %v332, 7
    %v334 = vsub.s32 %v331, %v333
    %v335 = vrot.slane %v215, %v334
    %vm336 = vcmask 982912
    %v337 = vsel %vm336, %v335, %v330
    %v338 = vadd.s32 %v235, 4294967176
    %v339 = vlaneseq
    %v340 = vshrl.u32 %v339, 7
    %v341 = vsub.s32 %v338, %v340
    %v342 = vrot.slane %v217, %v341
    %vm343 = vcmask 1048512
    %v344 = vsel %vm343, %v342, %v337
    %346 = vst [vmem:[#allocation3] sm:$0x1] %v344
    // Predicated region
    $region14: #{tpu_custom_call.1} parent=1 // pred_check
      _
    $region15: #{tpu_custom_call.1} parent=1 // pred_check_branch
      %348 = sbr.rel (0) target = $region17
    $region16: #{tpu_custom_call.1} parent=1 // pred_region
      %s350 = ssub.s32 16, 16
      %351 = vsyncadd [#allocation4], %s350
      %s353 = sshll.u32 [#allocation3], 4
      %s354 = int_to_ptr.vmem [resolvable:$true] %s353
      %356 = dma.vmem_to_hbm [thread:$0]  %s354, 16, %s3, [#allocation4]
    $region17: #{tpu_custom_call.1} parent=1 // pred_fallthru
      _
    // Predicated region
    $region18: #{tpu_custom_call.1} parent=1 // pred_check
      _
    $region19: #{tpu_custom_call.1} parent=1 // pred_check_branch
      %358 = sbr.rel (0) target = $region21
    $region20: #{tpu_custom_call.1} parent=1 // pred_region
      %359 = dma.done [#allocation4], 16
    $region21: #{tpu_custom_call.1} parent=1 // pred_fallthru
      _
    %360 = vsyncpa [#allocation4], 1

</llo_original>
